<compile_context>
chip_gen: v7x
topology: tpu7x:2x2x1
jax: 0.10.0
libtpu: 0.0.40
codegen_flags: <defaults>
</compile_context>

<pallas_src>
import functools

import jax
import jax.numpy as jnp
from jax.experimental import pallas as pl
from jax.experimental.pallas import tpu as pltpu

BN_EPS = 1e-5
OUT_LANE_PAD = 128   # lane-dense output store; wrapper slices back to n_classes


# ---------------------------------------------------------------------------
# Fused kernel: BN stats + BN apply + dropout(identity) + low-rank fusion.
# ---------------------------------------------------------------------------
def _lmf_kernel(x_ref, gamma_ref, beta_ref, w_ref, b_ref,
                out_ref, norms_ref, *, eps):
    """All operands are whole-array VMEM-resident (grid=(1,)).

    x      : (B, F) concatenated modality hidden states [audio|video|text|gap]
    gamma  : (1, F) concatenated BN weight
    beta   : (1, F) concatenated BN bias
    w      : (F, OUT_PAD) bf16, rank-folded audio factor; zero rows for the
             non-audio features, zero columns past n_classes
    b      : (1, OUT_PAD) f32, rank-folded ones-row contribution + fusion_bias
    """
    x = x_ref[...].astype(jnp.float32)

    # Whole-batch BatchNorm1d statistics (training-mode forward, biased var).
    # Two-pass centered variance avoids catastrophic cancellation.
    inv_n = 1.0 / x.shape[0]
    mean = jnp.sum(x, axis=0, keepdims=True) * inv_n
    centered = x - mean
    var = jnp.sum(centered * centered, axis=0, keepdims=True) * inv_n

    # BN folded to scale/shift: normed = centered * (gamma * rsqrt(var+eps)) + beta
    scale = gamma_ref[...] * jax.lax.rsqrt(var + eps)
    normed = centered * scale + beta_ref[...]

    # Dropout: identity (eval semantics).
    # TODO(synk): stochastic train-mode dropout mask not reproduced.
    norms_ref[...] = normed.astype(norms_ref.dtype)      # lane-dense (B, F) store

    # LMF fusion, rank loop pre-folded in the wrapper into one matmul:
    #   output = sum_r fw[0,r] * ([1, audio_norm] @ audio_factor[r]) + fusion_bias
    #          = audio_norm @ W_eff + b_eff
    # Zero-padded rows of `w` make the non-audio columns contribute exactly 0,
    # so we can feed the full lane-dense slab to the MXU (no lane slice).
    out = jnp.dot(normed.astype(jnp.bfloat16), w_ref[...],
                  preferred_element_type=jnp.float32) + b_ref[...]
    out_ref[...] = out.astype(out_ref.dtype)             # lane-dense (B, 128) store


# ---------------------------------------------------------------------------
# Wrapper.
# ---------------------------------------------------------------------------
def lmf_forward(audio_h, video_h, text_h, gap_h, params):
    """LMF head from the per-modality LSTM final hidden states.

    Returns (output, norms): `output` is LMF.forward's return value
    (batch, n_classes); `norms` is the BatchNorm'd (dropout = identity)
    modality slab with column order [audio | video | text | gap]
    (the SimpleModel tail).
    """
    b, h_a = audio_h.shape
    h_v, h_t, h_g = video_h.shape[1], text_h.shape[1], gap_h.shape[1]
    f = h_a + h_v + h_t + h_g

    # Layout plumbing in the wrapper: present one lane-dense (B, F) slab so all
    # kernel loads/stores and the BN stats run on full 128-lane vregs.
    whole = jnp.concatenate([audio_h, video_h, text_h, gap_h], axis=1)
    gamma = jnp.concatenate([params["audio_gamma"], params["video_gamma"],
                             params["text_gamma"], params["gap_gamma"]]
                            )[None, :].astype(jnp.float32)
    beta = jnp.concatenate([params["audio_beta"], params["video_beta"],
                            params["text_beta"], params["gap_beta"]]
                           )[None, :].astype(jnp.float32)

    factor = params["audio_factor"].astype(jnp.float32)   # (rank, h_a+1, out_dim)
    fw = params["fusion_weights"].astype(jnp.float32)     # (1, rank)
    rank, a1, out_dim = factor.shape
    assert a1 == h_a + 1

    # ---- Rank folding (exact algebra: output is linear in factor) ----------
    w_eff = jnp.einsum("r,rho->ho", fw[0], factor[:, 1:, :])          # (h_a, out_dim)
    b_eff = (jnp.einsum("r,ro->o", fw[0], factor[:, 0, :])[None, :]
             + params["fusion_bias"].astype(jnp.float32))             # (1, out_dim)

    out_pad = max(OUT_LANE_PAD, out_dim)
    # Zero rows for non-audio slab columns, zero cols past out_dim; bf16 MXU operand.
    w_pad = jnp.pad(w_eff, ((0, f - h_a), (0, out_pad - out_dim))).astype(jnp.bfloat16)
    b_pad = jnp.pad(b_eff, ((0, 0), (0, out_pad - out_dim)))

    # Whole batch resident in one grid step: correct choice on single-TC
    # v5e/v6e and far below VMEM limits everywhere.
    # TODO(synk): for batches whose slab does not fit VMEM, fall back to a
    #             two-pass (stats, then scale/shift apply) batch-tiled
    #             structure; that is also where a >=2-block 'parallel' batch
    #             grid pays off on dual-TC v7x.
    vmem_bytes = 4 * (2 * b * f + b * out_pad + 2 * f + out_pad) + 2 * f * out_pad
    assert vmem_bytes < 16 * 1024 * 1024, "batch too large for the fused single-pass kernel"

    kernel = functools.partial(_lmf_kernel, eps=BN_EPS)
    flops = 8 * b * f + 2 * b * f * out_pad
    bytes_accessed = (4 * (2 * b * f + b * out_pad + 2 * f + out_pad)
                      + 2 * f * out_pad)

    def _spec(shape):
        return pl.BlockSpec(shape, lambda i: (0, 0))

    out_full, norms = pl.pallas_call(
        kernel,
        out_shape=(jax.ShapeDtypeStruct((b, out_pad), jnp.float32),
                   jax.ShapeDtypeStruct((b, f), jnp.float32)),
        grid_spec=pltpu.PrefetchScalarGridSpec(
            num_scalar_prefetch=0,
            grid=(1,),
            in_specs=[
                _spec((b, f)),            # hidden-state slab
                _spec((1, f)),            # gamma
                _spec((1, f)),            # beta
                _spec((f, out_pad)),      # rank-folded, zero-padded factor (bf16)
                _spec((1, out_pad)),      # rank-folded bias
            ],
            out_specs=(_spec((b, out_pad)),   # lane-padded logits
                       _spec((b, f))),        # BN'd modality slab
        ),
        compiler_params=pltpu.CompilerParams(
            dimension_semantics=("arbitrary",)),
        cost_estimate=pl.CostEstimate(flops=flops, transcendentals=f,
                                      bytes_accessed=bytes_accessed),
    )(whole, gamma, beta, w_pad, b_pad)

    return out_full[:, :out_dim], norms


# ---------------------------------------------------------------------------
# Parameters and pure-JAX reference.
# ---------------------------------------------------------------------------
def init_params(key, h_a, h_v, h_t, h_g, rank, out_dim):
    """Synthetic LMF parameters (PyTorch shapes).  BN affine params are
    randomized slightly so the gamma/beta path is actually exercised."""
    ks = jax.random.split(key, 12)

    def xavier(k, shape):
        fan_in, fan_out = shape[-2], shape[-1]
        std = (2.0 / (fan_in + fan_out)) ** 0.5
        return std * jax.random.normal(k, shape, jnp.float32)

    def bn(kg, kb, h):
        return (1.0 + 0.1 * jax.random.normal(kg, (h,), jnp.float32),
                0.1 * jax.random.normal(kb, (h,), jnp.float32))

    a_g, a_b = bn(ks[0], ks[1], h_a)
    v_g, v_b = bn(ks[2], ks[3], h_v)
    t_g, t_b = bn(ks[4], ks[5], h_t)
    g_g, g_b = bn(ks[6], ks[7], h_g)
    return {
        "audio_gamma": a_g, "audio_beta": a_b,
        "video_gamma": v_g, "video_beta": v_b,
        "text_gamma": t_g, "text_beta": t_b,
        "gap_gamma": g_g, "gap_beta": g_b,
        # video_factor / text_factor exist in the module but never reach the
        # output (fusion_zy = fusion_audio); only audio_factor feeds the kernel.
        "audio_factor": xavier(ks[8], (rank, h_a + 1, out_dim)),
        "video_factor": xavier(ks[9], (rank, h_v + 1, out_dim)),
        "text_factor": xavier(ks[10], (rank, h_t + 1, out_dim)),
        "fusion_weights": xavier(ks[11], (1, rank)),
        "fusion_bias": jnp.zeros((1, out_dim), jnp.float32),
    }


def lmf_ref(audio_h, video_h, text_h, gap_h, params):
    """Pure-JAX reference mirroring the PyTorch forward, with the same
    rank-folded weight and bf16 MXU-operand cast the kernel uses (drop the
    bfloat16 casts for the exact-f32 PyTorch math; the fold itself is exact)."""
    def bn(x, gamma, beta):
        mean = jnp.mean(x, axis=0, keepdims=True)
        var = jnp.mean((x - mean) ** 2, axis=0, keepdims=True)
        return (x - mean) * jax.lax.rsqrt(var + BN_EPS) * gamma[None, :] + beta[None, :]

    audio_n = bn(audio_h, params["audio_gamma"], params["audio_beta"])
    video_n = bn(video_h, params["video_gamma"], params["video_beta"])
    text_n = bn(text_h, params["text_gamma"], params["text_beta"])
    gap_n = bn(gap_h, params["gap_gamma"], params["gap_beta"])
    norms = jnp.concatenate([audio_n, video_n, text_n, gap_n], axis=1)

    factor = params["audio_factor"]
    fw = params["fusion_weights"]
    w_eff = jnp.einsum("r,rho->ho", fw[0], factor[:, 1:, :])
    b_eff = (jnp.einsum("r,ro->o", fw[0], factor[:, 0, :])[None, :]
             + params["fusion_bias"])
    out = jnp.dot(audio_n.astype(jnp.bfloat16), w_eff.astype(jnp.bfloat16),
                  preferred_element_type=jnp.float32) + b_eff
    return out, norms


if __name__ == "__main__":
    # Small shapes consistent with the module: four modalities with hidden
    # size 32 each (fused feature width 128 -> lane-dense), rank-4 fusion,
    # n_classes = 2, batch 8 (whole batch resident, grid=(1,)).
    B, H_A, H_V, H_T, H_G, RANK, N_CLASSES = 8, 32, 32, 32, 32, 4, 2

    key = jax.random.PRNGKey(0)
    k_a, k_v, k_t, k_g, k_p = jax.random.split(key, 5)
    audio_h = jax.random.normal(k_a, (B, H_A), jnp.float32)
    video_h = jax.random.normal(k_v, (B, H_V), jnp.float32)
    text_h = jax.random.normal(k_t, (B, H_T), jnp.float32)
    gap_h = jax.random.normal(k_g, (B, H_G), jnp.float32)
    params = init_params(k_p, H_A, H_V, H_T, H_G, RANK, N_CLASSES)

    output, norms = lmf_forward(audio_h, video_h, text_h, gap_h, params)
    output = jax.block_until_ready(output)
    norms = jax.block_until_ready(norms)

    ref_out, ref_norms = lmf_ref(audio_h, video_h, text_h, gap_h, params)
    assert output.shape == (B, N_CLASSES)
    assert norms.shape == (B, H_A + H_V + H_T + H_G)
    assert jnp.allclose(norms, ref_norms, atol=1e-4, rtol=1e-4), "norms mismatch vs reference"
    assert jnp.allclose(output, ref_out, atol=5e-3, rtol=5e-3), "output mismatch vs reference"

    print("KERNEL_OK")
</pallas_src>

<mosaic_0001>
module attributes {stable_mosaic.version = 11 : i64} {
  func.func @_lmf_kernel(%arg0: i32, %arg1: memref<8x128xf32, #tpu.memory_space<vmem>>, %arg2: memref<1x128xf32, #tpu.memory_space<vmem>>, %arg3: memref<1x128xf32, #tpu.memory_space<vmem>>, %arg4: memref<128x128xbf16, #tpu.memory_space<vmem>>, %arg5: memref<1x128xf32, #tpu.memory_space<vmem>>, %arg6: memref<8x128xf32, #tpu.memory_space<vmem>>, %arg7: memref<8x128xf32, #tpu.memory_space<vmem>>) attributes {dimension_semantics = [#tpu.dimension_semantics<arbitrary>], iteration_bounds = array<i64: 1>, scalar_prefetch = 0 : i64, scratch_operands = 0 : i64, tpu.core_type = #tpu.core_type<tc>, window_params = [{pipeline_mode = #tpu.pipeline_mode<synchronous>, transform_indices = @transform_0, window_bounds = array<i64: 8, 128>}, {pipeline_mode = #tpu.pipeline_mode<synchronous>, transform_indices = @transform_1, window_bounds = array<i64: 1, 128>}, {pipeline_mode = #tpu.pipeline_mode<synchronous>, transform_indices = @transform_2, window_bounds = array<i64: 1, 128>}, {pipeline_mode = #tpu.pipeline_mode<synchronous>, transform_indices = @transform_3, window_bounds = array<i64: 128, 128>}, {pipeline_mode = #tpu.pipeline_mode<synchronous>, transform_indices = @transform_4, window_bounds = array<i64: 1, 128>}, {pipeline_mode = #tpu.pipeline_mode<synchronous>, transform_indices = @transform_5, window_bounds = array<i64: 8, 128>}, {pipeline_mode = #tpu.pipeline_mode<synchronous>, transform_indices = @transform_6, window_bounds = array<i64: 8, 128>}]} {
    %c0 = arith.constant 0 : index
    %c0_0 = arith.constant 0 : index
    %0 = vector.load %arg1[%c0, %c0_0] : memref<8x128xf32, #tpu.memory_space<vmem>>, vector<8x128xf32>
    %cst = arith.constant dense<0.000000e+00> : vector<128xf32>
    %1 = vector.multi_reduction <add>, %0, %cst [0] : vector<8x128xf32> to vector<128xf32>
    %2 = vector.shape_cast %1 : vector<128xf32> to vector<1x128xf32>
    %cst_1 = arith.constant 1.250000e-01 : f32
    %3 = vector.broadcast %cst_1 : f32 to vector<1x128xf32>
    %4 = arith.mulf %2, %3 : vector<1x128xf32>
    %5 = vector.broadcast %4 : vector<1x128xf32> to vector<8x128xf32>
    %6 = arith.subf %0, %5 : vector<8x128xf32>
    %7 = arith.mulf %6, %6 : vector<8x128xf32>
    %cst_2 = arith.constant dense<0.000000e+00> : vector<128xf32>
    %8 = vector.multi_reduction <add>, %7, %cst_2 [0] : vector<8x128xf32> to vector<128xf32>
    %9 = vector.shape_cast %8 : vector<128xf32> to vector<1x128xf32>
    %cst_3 = arith.constant 1.250000e-01 : f32
    %10 = vector.broadcast %cst_3 : f32 to vector<1x128xf32>
    %11 = arith.mulf %9, %10 : vector<1x128xf32>
    %c0_4 = arith.constant 0 : index
    %c0_5 = arith.constant 0 : index
    %12 = vector.load %arg2[%c0_4, %c0_5] : memref<1x128xf32, #tpu.memory_space<vmem>>, vector<1x128xf32>
    %cst_6 = arith.constant 9.99999974E-6 : f32
    %13 = vector.broadcast %cst_6 : f32 to vector<1x128xf32>
    %14 = arith.addf %11, %13 : vector<1x128xf32>
    %15 = math.rsqrt %14 : vector<1x128xf32>
    %16 = arith.mulf %12, %15 : vector<1x128xf32>
    %17 = vector.broadcast %16 : vector<1x128xf32> to vector<8x128xf32>
    %18 = arith.mulf %6, %17 : vector<8x128xf32>
    %c0_7 = arith.constant 0 : index
    %c0_8 = arith.constant 0 : index
    %19 = vector.load %arg3[%c0_7, %c0_8] : memref<1x128xf32, #tpu.memory_space<vmem>>, vector<1x128xf32>
    %20 = vector.broadcast %19 : vector<1x128xf32> to vector<8x128xf32>
    %21 = arith.addf %18, %20 : vector<8x128xf32>
    %c0_9 = arith.constant 0 : index
    %c0_10 = arith.constant 0 : index
    %22 = vector.load %arg7[%c0_9, %c0_10] : memref<8x128xf32, #tpu.memory_space<vmem>>, vector<8x128xf32>
    tpu.vector_store %arg7[%c0_9, %c0_10], %21 {strides = array<i32>} : memref<8x128xf32, #tpu.memory_space<vmem>>, vector<8x128xf32>,
    %23 = arith.truncf %21 : vector<8x128xf32> to vector<8x128xbf16>
    %c0_11 = arith.constant 0 : index
    %c0_12 = arith.constant 0 : index
    %24 = vector.load %arg4[%c0_11, %c0_12] : memref<128x128xbf16, #tpu.memory_space<vmem>>, vector<128x128xbf16>
    %cst_13 = arith.constant dense<0.000000e+00> : vector<8x128xf32>
    %25 = tpu.matmul %23, %24, %cst_13 {dimension_numbers = #tpu.dot_dimension_numbers<[1], [0], [0], [1], [0, 0, 1, 1], [], []>} : vector<8x128xbf16>, vector<128x128xbf16>, vector<8x128xf32> -> vector<8x128xf32>
    %c0_14 = arith.constant 0 : index
    %c0_15 = arith.constant 0 : index
    %26 = vector.load %arg5[%c0_14, %c0_15] : memref<1x128xf32, #tpu.memory_space<vmem>>, vector<1x128xf32>
    %27 = vector.broadcast %26 : vector<1x128xf32> to vector<8x128xf32>
    %28 = arith.addf %25, %27 : vector<8x128xf32>
    %c0_16 = arith.constant 0 : index
    %c0_17 = arith.constant 0 : index
    %29 = vector.load %arg6[%c0_16, %c0_17] : memref<8x128xf32, #tpu.memory_space<vmem>>, vector<8x128xf32>
    tpu.vector_store %arg6[%c0_16, %c0_17], %28 {strides = array<i32>} : memref<8x128xf32, #tpu.memory_space<vmem>>, vector<8x128xf32>,
    return
  }
  func.func @transform_0(%arg0: i32) -> (i32, i32) {
    %c0_i32 = arith.constant 0 : i32
    %c0_i32_0 = arith.constant 0 : i32
    %c0_i32_1 = arith.constant 0 : i32
    return %c0_i32, %c0_i32_0 : i32, i32
  }
  func.func @transform_1(%arg0: i32) -> (i32, i32) {
    %c0_i32 = arith.constant 0 : i32
    %c0_i32_0 = arith.constant 0 : i32
    %c0_i32_1 = arith.constant 0 : i32
    return %c0_i32, %c0_i32_0 : i32, i32
  }
  func.func @transform_2(%arg0: i32) -> (i32, i32) {
    %c0_i32 = arith.constant 0 : i32
    %c0_i32_0 = arith.constant 0 : i32
    %c0_i32_1 = arith.constant 0 : i32
    return %c0_i32, %c0_i32_0 : i32, i32
  }
  func.func @transform_3(%arg0: i32) -> (i32, i32) {
    %c0_i32 = arith.constant 0 : i32
    %c0_i32_0 = arith.constant 0 : i32
    %c0_i32_1 = arith.constant 0 : i32
    return %c0_i32, %c0_i32_0 : i32, i32
  }
  func.func @transform_4(%arg0: i32) -> (i32, i32) {
    %c0_i32 = arith.constant 0 : i32
    %c0_i32_0 = arith.constant 0 : i32
    %c0_i32_1 = arith.constant 0 : i32
    return %c0_i32, %c0_i32_0 : i32, i32
  }
  func.func @transform_5(%arg0: i32) -> (i32, i32) {
    %c0_i32 = arith.constant 0 : i32
    %c0_i32_0 = arith.constant 0 : i32
    %c0_i32_1 = arith.constant 0 : i32
    return %c0_i32, %c0_i32_0 : i32, i32
  }
  func.func @transform_6(%arg0: i32) -> (i32, i32) {
    %c0_i32 = arith.constant 0 : i32
    %c0_i32_0 = arith.constant 0 : i32
    %c0_i32_1 = arith.constant 0 : i32
    return %c0_i32, %c0_i32_0 : i32, i32
  }
}

</mosaic_0001>

<llo_original>
// kernel: tpu_custom_call.1
$region0: #{tpu_custom_call.1}
  #allocation0 [shape = 'u32[]', space=smem, size = 0x4, offset = 0x4, fixed_abs, tag = 'smem constant byte address 0x4 - core index']
  #allocation1 [shape = 'u32[144,128]{1,0:T(1,128)}', space=vmem, size = 0x12000, scoped, tag = 'internal scratch']
  %s0 = inlined_call_operand.hbm [shape: f32[8,128], index: 0, kind: input, shape index: {}]
  %s1 = inlined_call_operand.vmem [shape: f32[1,128], index: 1, kind: input, shape index: {}]
  %s2 = inlined_call_operand.vmem [shape: f32[1,128], index: 2, kind: input, shape index: {}]
  %s3 = inlined_call_operand.hbm [shape: bf16[128,128], index: 3, kind: input, shape index: {}]
  %s4 = inlined_call_operand.vmem [shape: f32[1,128], index: 4, kind: input, shape index: {}]
  %s5 = inlined_call_operand.hbm [shape: f32[8,128], index: 5, kind: output, shape index: {0}]
  %s6 = inlined_call_operand.hbm [shape: f32[8,128], index: 6, kind: output, shape index: {1}]
  %7 = xla_tuple %s5, %s6
  %s8 = sld [smem:[#allocation0]]
  $region46: #{tpu_custom_call.1} parent=0
    _
  %s10 = ssub.s32 1, %s8
  %s11 = scalar_select 0, %s10, %s8
  $region1: #{tpu_custom_call.1} parent=0
    #allocation2 [shape = 'u8[4096]{0}', space=vmem, size = 0x1000, scoped, tag = 'input window, operand 0, single buffered']
    #allocation3 [shape = 's32[1]{0}', space=sflag, size = 0x4, scoped, tag = 'scoped memory for tpu_custom_call.1']
    #allocation4 [shape = 's32[1]{0}', space=sflag, size = 0x4, scoped, tag = 'scoped memory for tpu_custom_call.1']
    #allocation5 [shape = 'u8[32768]{0}', space=vmem, size = 0x8000, scoped, tag = 'input window, operand 3, single buffered']
    #allocation6 [shape = 's32[1]{0}', space=sflag, size = 0x4, scoped, tag = 'scoped memory for tpu_custom_call.1']
    #allocation7 [shape = 'u8[4096]{0}', space=vmem, size = 0x1000, scoped, tag = 'output window, operand 0, single buffered']
    #allocation8 [shape = 'u8[4096]{0}', space=vmem, size = 0x1000, scoped, tag = 'output window, operand 1, single buffered']
    #allocation9 [shape = 's32[1]{0}', space=sflag, size = 0x4, scoped, tag = 'scoped memory for tpu_custom_call.1']
    %12 = vsyncpa [#allocation3], 0
    %13 = vsyncpa [#allocation6], 0
    %14 = vsyncpa [#allocation4], 0
    %15 = vsyncpa [#allocation9], 0
    // Predicated region
    $region2: #{tpu_custom_call.1} parent=1 // pred_check
      _
    $region3: #{tpu_custom_call.1} parent=1 // pred_check_branch
      %17 = sbr.rel (0) target = $region5
    $region4: #{tpu_custom_call.1} parent=1 // pred_region
      %s19 = ssub.s32 128, 128
      %20 = vsyncadd [#allocation3], %s19
      %s22 = sshll.u32 [#allocation2], 4
      %s23 = int_to_ptr.vmem [resolvable:$true] %s22
      %25 = dma.hbm_to_vmem [thread:$0]  %s0, 128, %s23, [#allocation3]
    $region5: #{tpu_custom_call.1} parent=1 // pred_fallthru
      _
    // Predicated region
    $region6: #{tpu_custom_call.1} parent=1 // pred_check
      _
    $region7: #{tpu_custom_call.1} parent=1 // pred_check_branch
      %27 = sbr.rel (0) target = $region9
    $region8: #{tpu_custom_call.1} parent=1 // pred_region
      _
    $region9: #{tpu_custom_call.1} parent=1 // pred_fallthru
      _
    // Predicated region
    $region10: #{tpu_custom_call.1} parent=1 // pred_check
      _
    $region11: #{tpu_custom_call.1} parent=1 // pred_check_branch
      %29 = sbr.rel (0) target = $region13
    $region12: #{tpu_custom_call.1} parent=1 // pred_region
      _
    $region13: #{tpu_custom_call.1} parent=1 // pred_fallthru
      _
    // Predicated region
    $region14: #{tpu_custom_call.1} parent=1 // pred_check
      _
    $region15: #{tpu_custom_call.1} parent=1 // pred_check_branch
      %31 = sbr.rel (0) target = $region17
    $region16: #{tpu_custom_call.1} parent=1 // pred_region
      %s33 = ssub.s32 1024, 1024
      %34 = vsyncadd [#allocation6], %s33
      %s35 = sshll.u32 [#allocation5], 4
      %s36 = int_to_ptr.vmem [resolvable:$true] %s35
      %41 = dma.hbm_to_vmem [thread:$0]  %s3, 1024, %s36, [#allocation6], 64, 64, 4
    $region17: #{tpu_custom_call.1} parent=1 // pred_fallthru
      _
    // Predicated region
    $region18: #{tpu_custom_call.1} parent=1 // pred_check
      _
    $region19: #{tpu_custom_call.1} parent=1 // pred_check_branch
      %43 = sbr.rel (0) target = $region21
    $region20: #{tpu_custom_call.1} parent=1 // pred_region
      _
    $region21: #{tpu_custom_call.1} parent=1 // pred_fallthru
      _
    // Predicated region
    $region22: #{tpu_custom_call.1} parent=1 // pred_check
      _
    $region23: #{tpu_custom_call.1} parent=1 // pred_check_branch
      %45 = sbr.rel (0) target = $region25
    $region24: #{tpu_custom_call.1} parent=1 // pred_region
      %46 = dma.done [#allocation3], 128
    $region25: #{tpu_custom_call.1} parent=1 // pred_fallthru
      _
    // Predicated region
    $region26: #{tpu_custom_call.1} parent=1 // pred_check
      _
    $region27: #{tpu_custom_call.1} parent=1 // pred_check_branch
      %48 = sbr.rel (0) target = $region29
    $region28: #{tpu_custom_call.1} parent=1 // pred_region
      %49 = dma.done [#allocation6], 1024
    $region29: #{tpu_custom_call.1} parent=1 // pred_fallthru
      _
    %v51 = vld [vmem:[#allocation2] sm:$0xff]
    %v52 = vrot.slane %v51, 4
    %v53 = vadd.f32 %v51, %v52
    %v54 = vrot.slane %v53, 2
    %v55 = vadd.f32 %v53, %v54
    %v56 = vrot.slane %v55, 1
    %v57 = vadd.f32 %v55, %v56
    %v58 = vmul.f32 %v57, 0.125
    %v59 = vsub.f32 %v51, %v58
    %v60 = vmul.f32 %v59, %v59
    %v61 = vrot.slane %v60, 4
    %v62 = vadd.f32 %v60, %v61
    %v63 = vrot.slane %v62, 2
    %v64 = vadd.f32 %v62, %v63
    %v65 = vrot.slane %v64, 1
    %v66 = vadd.f32 %v64, %v65
    %v67 = vmul.f32 %v66, 0.125
    %v68 = vld [vmem:[%s1] sm:$0x1]
    %v69 = vadd.f32 %v67, 1e-05
    %v70 = vrsqrt.pop %v69
    %v71 = vmul.f32 %v68, %v70
    %v73 = vlaneseq
    %v74 = vshrl.u32 %v73, 7
    %v75 = vsub.s32 0, %v74
    %v76 = vrot.slane %v71, %v75
    %v78 = vmul.f32 %v59, %v76
    %v79 = vld [vmem:[%s2] sm:$0x1]
    %v81 = vlaneseq
    %v82 = vshrl.u32 %v81, 7
    %v83 = vsub.s32 0, %v82
    %v84 = vrot.slane %v79, %v83
    %v86 = vadd.f32 %v78, %v84
    %87 = vst [vmem:[#allocation8] sm:$0xff] %v86
    %v88 = vpack.c.bf16 %v86, %v86
    %v89 = vld [vmem:[#allocation5] sm:$0xf]
    %v90 = vld [vmem:[#allocation5 + $0x4] sm:$0xf]
    %v91 = vld [vmem:[#allocation5 + $0x8] sm:$0xf]
    %v92 = vld [vmem:[#allocation5 + $0xc] sm:$0xf]
    %v93 = vld [vmem:[#allocation5 + $0x10] sm:$0xf]
    %v94 = vld [vmem:[#allocation5 + $0x14] sm:$0xf]
    %v95 = vld [vmem:[#allocation5 + $0x18] sm:$0xf]
    %v96 = vld [vmem:[#allocation5 + $0x1c] sm:$0xf]
    %v97 = vld [vmem:[#allocation5 + $0x20] sm:$0xf]
    %v98 = vld [vmem:[#allocation5 + $0x24] sm:$0xf]
    %v99 = vld [vmem:[#allocation5 + $0x28] sm:$0xf]
    %v100 = vld [vmem:[#allocation5 + $0x2c] sm:$0xf]
    %v101 = vld [vmem:[#allocation5 + $0x30] sm:$0xf]
    %v102 = vld [vmem:[#allocation5 + $0x34] sm:$0xf]
    %v103 = vld [vmem:[#allocation5 + $0x38] sm:$0xf]
    %v104 = vld [vmem:[#allocation5 + $0x3c] sm:$0xf]
    %v105 = vld [vmem:[%s4] sm:$0x1]
    %v107 = vlaneseq
    %v108 = vshrl.u32 %v107, 7
    %v109 = vsub.s32 0, %v108
    %v110 = vrot.slane %v105, %v109
    %v128 = vunpack.c.l.b16 %v89
    %v129 = vunpack.c.l.b16 %v90
    %v130 = vunpack.c.l.b16 %v91
    %v131 = vunpack.c.l.b16 %v92
    %v132 = vunpack.c.l.b16 %v93
    %v133 = vunpack.c.l.b16 %v94
    %v134 = vunpack.c.l.b16 %v95
    %v135 = vunpack.c.l.b16 %v96
    %v136 = vunpack.c.l.b16 %v97
    %v137 = vunpack.c.l.b16 %v98
    %v138 = vunpack.c.l.b16 %v99
    %v139 = vunpack.c.l.b16 %v100
    %v140 = vunpack.c.l.b16 %v101
    %v141 = vunpack.c.l.b16 %v102
    %v142 = vunpack.c.l.b16 %v103
    %v143 = vunpack.c.l.b16 %v104
    %v144 = vpack.c.b16 %v129, %v128
    %v145 = vpack.c.b16 %v131, %v130
    %v146 = vpack.c.b16 %v133, %v132
    %v147 = vpack.c.b16 %v135, %v134
    %v148 = vpack.c.b16 %v137, %v136
    %v149 = vpack.c.b16 %v139, %v138
    %v150 = vpack.c.b16 %v141, %v140
    %v151 = vpack.c.b16 %v143, %v142
    %160 = vmatprep.subr.bf16.mxu0 0
    %161 = vmatpush1.bf16.msra.mxu0 %v144
    %162 = vmatprep.subr.bf16.mxu0 0
    %163 = vmatpush1.bf16.msra.mxu0 %v145
    %164 = vmatprep.subr.bf16.mxu0 0
    %165 = vmatpush1.bf16.msra.mxu0 %v146
    %166 = vmatprep.subr.bf16.mxu0 0
    %167 = vmatpush1.bf16.msra.mxu0 %v147
    %168 = vmatprep.subr.bf16.mxu0 0
    %169 = vmatpush1.bf16.msra.mxu0 %v148
    %170 = vmatprep.subr.bf16.mxu0 0
    %171 = vmatpush1.bf16.msra.mxu0 %v149
    %172 = vmatprep.subr.bf16.mxu0 0
    %173 = vmatpush1.bf16.msra.mxu0 %v150
    %174 = vmatprep.subr.bf16.mxu0 0
    %175 = vmatpush1.bf16.msra.mxu0 %v151
    %176 = vmatprep.subr.bf16.mxu0 0
    %177 = vmatpush1.bf16.msra.mxu0 0
    %178 = vmatprep.subr.bf16.mxu0 0
    %179 = vmatpush1.bf16.msra.mxu0 0
    %180 = vmatprep.subr.bf16.mxu0 0
    %181 = vmatpush1.bf16.msra.mxu0 0
    %182 = vmatprep.subr.bf16.mxu0 0
    %183 = vmatpush1.bf16.msra.mxu0 0
    %184 = vmatprep.subr.bf16.mxu0 0
    %185 = vmatpush1.bf16.msra.mxu0 0
    %186 = vmatprep.subr.bf16.mxu0 0
    %187 = vmatpush1.bf16.msra.mxu0 0
    %188 = vmatprep.subr.bf16.mxu0 0
    %189 = vmatpush1.bf16.msra.mxu0 0
    %190 = vmatprep.subr.bf16.mxu0 0
    %191 = vmatpush1.bf16.msra.mxu0 0
    %192 = vmatprep.mubr.bf16.mxu0 0
    %193 = vmatmul.mubr.bf16.gmra.mrb[0].mxu0 %v88
    %v194 = vpop.f32.mrb[0].mxu0
    %v195 = vadd.f32 %v110, %v194
    %v196 = vpop.f32.mrb[0].mxu0
    %v197 = vpop.f32.mrb[0].mxu0
    %v198 = vpop.f32.mrb[0].mxu0
    %199 = vdwg.mxu0
    %200 = vst [vmem:[#allocation7] sm:$0xff] %v195
    // Predicated region
    $region30: #{tpu_custom_call.1} parent=1 // pred_check
      _
    $region31: #{tpu_custom_call.1} parent=1 // pred_check_branch
      %202 = sbr.rel (0) target = $region33
    $region32: #{tpu_custom_call.1} parent=1 // pred_region
      %s204 = ssub.s32 128, 128
      %205 = vsyncadd [#allocation4], %s204
      %s207 = sshll.u32 [#allocation7], 4
      %s208 = int_to_ptr.vmem [resolvable:$true] %s207
      %210 = dma.vmem_to_hbm [thread:$0]  %s208, 128, %s5, [#allocation4]
    $region33: #{tpu_custom_call.1} parent=1 // pred_fallthru
      _
    // Predicated region
    $region34: #{tpu_custom_call.1} parent=1 // pred_check
      _
    $region35: #{tpu_custom_call.1} parent=1 // pred_check_branch
      %212 = sbr.rel (0) target = $region37
    $region36: #{tpu_custom_call.1} parent=1 // pred_region
      %s214 = ssub.s32 128, 128
      %215 = vsyncadd [#allocation9], %s214
      %s217 = sshll.u32 [#allocation8], 4
      %s218 = int_to_ptr.vmem [resolvable:$true] %s217
      %220 = dma.vmem_to_hbm [thread:$0]  %s218, 128, %s6, [#allocation9]
    $region37: #{tpu_custom_call.1} parent=1 // pred_fallthru
      _
    // Predicated region
    $region38: #{tpu_custom_call.1} parent=1 // pred_check
      _
    $region39: #{tpu_custom_call.1} parent=1 // pred_check_branch
      %222 = sbr.rel (0) target = $region41
    $region40: #{tpu_custom_call.1} parent=1 // pred_region
      %223 = dma.done [#allocation4], 128
    $region41: #{tpu_custom_call.1} parent=1 // pred_fallthru
      _
    // Predicated region
    $region42: #{tpu_custom_call.1} parent=1 // pred_check
      _
    $region43: #{tpu_custom_call.1} parent=1 // pred_check_branch
      %225 = sbr.rel (0) target = $region45
    $region44: #{tpu_custom_call.1} parent=1 // pred_region
      %226 = dma.done [#allocation9], 128
    $region45: #{tpu_custom_call.1} parent=1 // pred_fallthru
      _
    %227 = vsyncpa [#allocation3], 1
    %228 = vsyncpa [#allocation6], 1
    %229 = vsyncpa [#allocation4], 1
    %230 = vsyncpa [#allocation9], 1

</llo_original>
